<compile_context>
chip_gen: v7x
topology: tpu7x:2x2x1
jax: 0.10.0
libtpu: 0.0.40
codegen_flags: <defaults>
</compile_context>

<pallas_src>
import jax
import jax.numpy as jnp
from jax.experimental import pallas as pl
from jax.experimental.pallas import tpu as pltpu


def fused_flow_kernel(x_ref, w1_ref, b1_ref, w2_ref, b2_ref, z_ref, ld_ref):
    """All coupling layers, executed over the layer grid axis with z and the
    log-det accumulator resident in VMEM (output refs reused as carry)."""
    layer = pl.program_id(1)

    @pl.when(layer == 0)
    def _():
        z_ref[...] = x_ref[...]
        ld_ref[...] = jnp.zeros_like(ld_ref)

    z = z_ref[...]
    dh = z.shape[1] // 2
    x1 = z[:, :dh]          # conditioning half (passthrough)
    x2 = z[:, dh:]          # transformed half

    # MLP conditioner on x1 -> (s, t); both matmuls on the MXU, f32 accum.
    h = jnp.tanh(
        jnp.dot(x1, w1_ref[0], preferred_element_type=jnp.float32) + b1_ref[0]
    )
    st = jnp.dot(h, w2_ref[0], preferred_element_type=jnp.float32) + b2_ref[0]
    s = jnp.tanh(st[:, :dh])        # bounded log-scale -> exp(s) cannot overflow
    t = st[:, dh:]

    z2 = x2 * jnp.exp(s) + t

    # Running per-sample log-det, kept in VMEM; single HBM writeback at the end.
    ld_ref[...] = ld_ref[...] + jnp.sum(s, axis=1, keepdims=True)

    # Coupling update + half-swap permutation fused into two lane-aligned
    # half-writes (x1/z2 are register values, so no aliasing hazard).
    # NOTE: the half-swap is applied after every layer, including the last,
    # matching the original per-layer flow semantics.
    z_ref[:, :dh] = z2
    z_ref[:, dh:] = x1


def _pick_batch_tile(batch):
    """Largest multiple-of-8 divisor of batch, capped at 256 (MXU-friendly)."""
    for bm in (256, 128, 64, 32, 16, 8):
        if batch % bm == 0:
            return bm
    return batch  # tiny/odd batch: single full-extent block


def nf_model_forward(x, w1s, b1s, w2s, b2s):
    """Equivalent of NFModelWrapper.forward(x, reverse=False):
    runs the flow forward, returns (z[-1], total_log_det)."""
    B, D = x.shape
    L, dh, H = w1s.shape
    bm = _pick_batch_tile(B)

    flops = int(L * (2 * B * dh * H + 2 * B * H * D + 4 * B * D))
    transcendentals = int(L * B * (H + 2 * dh))
    bytes_accessed = int(
        4 * (2 * B * D + B + L * (dh * H + H + H * D + D))
    )

    z, ld = pl.pallas_call(
        fused_flow_kernel,
        grid=(B // bm, L),
        in_specs=[
            pl.BlockSpec((bm, D), lambda b, l: (b, 0)),          # x (read at l==0)
            pl.BlockSpec((1, dh, H), lambda b, l: (l, 0, 0)),    # W1[l]
            pl.BlockSpec((1, 1, H), lambda b, l: (l, 0, 0)),     # b1[l]
            pl.BlockSpec((1, H, D), lambda b, l: (l, 0, 0)),     # W2[l]
            pl.BlockSpec((1, 1, D), lambda b, l: (l, 0, 0)),     # b2[l]
        ],
        out_specs=[
            pl.BlockSpec((bm, D), lambda b, l: (b, 0)),          # z (resident carry)
            pl.BlockSpec((bm, 1), lambda b, l: (b, 0)),          # log-det accumulator
        ],
        out_shape=[
            jax.ShapeDtypeStruct((B, D), jnp.float32),
            jax.ShapeDtypeStruct((B, 1), jnp.float32),
        ],
        compiler_params=pltpu.CompilerParams(
            dimension_semantics=("parallel", "arbitrary"),
        ),
        cost_estimate=pl.CostEstimate(
            flops=flops,
            transcendentals=transcendentals,
            bytes_accessed=bytes_accessed,
        ),
    )(x, w1s, b1s, w2s, b2s)
    return z, ld[:, 0]


def nf_model_forward_ref(x, w1s, b1s, w2s, b2s):
    """Pure-JAX reference of the same flow (for correctness check)."""
    B, D = x.shape
    dh = D // 2
    hp = jax.lax.Precision.HIGHEST
    z = x
    ld = jnp.zeros((B,), jnp.float32)
    for l in range(w1s.shape[0]):
        x1, x2 = z[:, :dh], z[:, dh:]
        h = jnp.tanh(jnp.dot(x1, w1s[l], precision=hp) + b1s[l])
        st = jnp.dot(h, w2s[l], precision=hp) + b2s[l]
        s = jnp.tanh(st[:, :dh])
        t = st[:, dh:]
        z2 = x2 * jnp.exp(s) + t
        ld = ld + jnp.sum(s, axis=1)
        z = jnp.concatenate([z2, x1], axis=1)   # coupling + half-swap
    return z, ld


def init_flow_params(key, dim, hidden, n_layers):
    dh = dim // 2
    k1, k2 = jax.random.split(key)
    w1s = jax.random.normal(k1, (n_layers, dh, hidden), jnp.float32) * 0.1
    b1s = jnp.zeros((n_layers, 1, hidden), jnp.float32)
    w2s = jax.random.normal(k2, (n_layers, hidden, dim), jnp.float32) * 0.1
    b2s = jnp.zeros((n_layers, 1, dim), jnp.float32)
    return w1s, b1s, w2s, b2s


if __name__ == "__main__":
    B, D, H, N_LAYERS = 8, 256, 128, 4

    key = jax.random.PRNGKey(0)
    kx, kp = jax.random.split(key)
    x = jax.random.normal(kx, (B, D), jnp.float32)
    params = init_flow_params(kp, D, H, N_LAYERS)

    fwd = jax.jit(nf_model_forward)
    z_final, log_det = fwd(x, *params)
    jax.block_until_ready((z_final, log_det))

    # Correctness vs. pure-JAX reference of the same flow.
    z_ref, ld_ref = nf_model_forward_ref(x, *params)

    assert z_final.shape == (B, D)
    assert log_det.shape == (B,)
    assert bool(jnp.all(jnp.isfinite(z_final)))
    assert bool(jnp.all(jnp.isfinite(log_det)))
    assert bool(jnp.allclose(z_final, z_ref, rtol=2e-3, atol=2e-3))
    assert bool(jnp.allclose(log_det, ld_ref, rtol=2e-3, atol=2e-3))

    # TODO(synk): reverse=True branch (model.flow.backward) not implemented;
    # the forward under test never takes it.
    print("KERNEL_OK")
</pallas_src>

<mosaic_0001>
module attributes {stable_mosaic.version = 11 : i64} {
  func.func @fused_flow_kernel(%arg0: i32, %arg1: i32, %arg2: memref<8x256xf32, #tpu.memory_space<vmem>>, %arg3: memref<1x128x128xf32, #tpu.memory_space<vmem>>, %arg4: memref<1x1x128xf32, #tpu.memory_space<vmem>>, %arg5: memref<1x128x256xf32, #tpu.memory_space<vmem>>, %arg6: memref<1x1x256xf32, #tpu.memory_space<vmem>>, %arg7: memref<8x256xf32, #tpu.memory_space<vmem>>, %arg8: memref<8x1xf32, #tpu.memory_space<vmem>>) attributes {dimension_semantics = [#tpu.dimension_semantics<parallel>, #tpu.dimension_semantics<arbitrary>], iteration_bounds = array<i64: 1, 4>, scalar_prefetch = 0 : i64, scratch_operands = 0 : i64, tpu.core_type = #tpu.core_type<tc>, window_params = [{transform_indices = @transform_0, window_bounds = array<i64: 8, 256>}, {transform_indices = @transform_1, window_bounds = array<i64: 1, 128, 128>}, {transform_indices = @transform_2, window_bounds = array<i64: 1, 1, 128>}, {transform_indices = @transform_3, window_bounds = array<i64: 1, 128, 256>}, {transform_indices = @transform_4, window_bounds = array<i64: 1, 1, 256>}, {transform_indices = @transform_5, window_bounds = array<i64: 8, 256>}, {transform_indices = @transform_6, window_bounds = array<i64: 8, 1>}]} {
    %c0_i32 = arith.constant 0 : i32
    %0 = arith.cmpi eq, %arg1, %c0_i32 : i32
    %1 = arith.extui %0 : i1 to i32
    %c0_i32_0 = arith.constant 0 : i32
    %2 = arith.cmpi ne, %1, %c0_i32_0 : i32
    scf.if %2 {
      %c0_23 = arith.constant 0 : index
      %c0_24 = arith.constant 0 : index
      %34 = vector.load %arg2[%c0_23, %c0_24] : memref<8x256xf32, #tpu.memory_space<vmem>>, vector<8x256xf32>
      %c0_25 = arith.constant 0 : index
      %c0_26 = arith.constant 0 : index
      %35 = vector.load %arg7[%c0_25, %c0_26] : memref<8x256xf32, #tpu.memory_space<vmem>>, vector<8x256xf32>
      tpu.vector_store %arg7[%c0_25, %c0_26], %34 {strides = array<i32>} : memref<8x256xf32, #tpu.memory_space<vmem>>, vector<8x256xf32>,
      %cst_27 = arith.constant 0.000000e+00 : f32
      %36 = vector.broadcast %cst_27 : f32 to vector<8x1xf32>
      %c0_28 = arith.constant 0 : index
      %c0_29 = arith.constant 0 : index
      %37 = vector.load %arg8[%c0_28, %c0_29] : memref<8x1xf32, #tpu.memory_space<vmem>>, vector<8x1xf32>
      tpu.vector_store %arg8[%c0_28, %c0_29], %36 {strides = array<i32>} : memref<8x1xf32, #tpu.memory_space<vmem>>, vector<8x1xf32>,
    } else {
    }
    %c0 = arith.constant 0 : index
    %c0_1 = arith.constant 0 : index
    %3 = vector.load %arg7[%c0, %c0_1] : memref<8x256xf32, #tpu.memory_space<vmem>>, vector<8x256xf32>
    %4 = vector.extract_strided_slice %3 {offsets = [0, 0], sizes = [8, 128], strides = [1, 1]} : vector<8x256xf32> to vector<8x128xf32>
    %5 = vector.extract_strided_slice %3 {offsets = [0, 128], sizes = [8, 128], strides = [1, 1]} : vector<8x256xf32> to vector<8x128xf32>
    %c0_2 = arith.constant 0 : index
    %c0_3 = arith.constant 0 : index
    %c0_4 = arith.constant 0 : index
    %6 = vector.load %arg3[%c0_2, %c0_3, %c0_4] : memref<1x128x128xf32, #tpu.memory_space<vmem>>, vector<1x128x128xf32>
    %7 = vector.shape_cast %6 : vector<1x128x128xf32> to vector<128x128xf32>
    %cst = arith.constant dense<0.000000e+00> : vector<8x128xf32>
    %8 = tpu.matmul %4, %7, %cst {dimension_numbers = #tpu.dot_dimension_numbers<[1], [0], [0], [1], [0, 0, 1, 1], [], []>} : vector<8x128xf32>, vector<128x128xf32>, vector<8x128xf32> -> vector<8x128xf32>
    %c0_5 = arith.constant 0 : index
    %c0_6 = arith.constant 0 : index
    %c0_7 = arith.constant 0 : index
    %9 = vector.load %arg4[%c0_5, %c0_6, %c0_7] : memref<1x1x128xf32, #tpu.memory_space<vmem>>, vector<1x1x128xf32>
    %10 = vector.shape_cast %9 : vector<1x1x128xf32> to vector<1x128xf32>
    %11 = vector.broadcast %10 : vector<1x128xf32> to vector<8x128xf32>
    %12 = arith.addf %8, %11 : vector<8x128xf32>
    %13 = math.tanh %12 : vector<8x128xf32>
    %c0_8 = arith.constant 0 : index
    %c0_9 = arith.constant 0 : index
    %c0_10 = arith.constant 0 : index
    %14 = vector.load %arg5[%c0_8, %c0_9, %c0_10] : memref<1x128x256xf32, #tpu.memory_space<vmem>>, vector<1x128x256xf32>
    %15 = vector.shape_cast %14 : vector<1x128x256xf32> to vector<128x256xf32>
    %cst_11 = arith.constant dense<0.000000e+00> : vector<8x256xf32>
    %16 = tpu.matmul %13, %15, %cst_11 {dimension_numbers = #tpu.dot_dimension_numbers<[1], [0], [0], [1], [0, 0, 1, 1], [], []>} : vector<8x128xf32>, vector<128x256xf32>, vector<8x256xf32> -> vector<8x256xf32>
    %c0_12 = arith.constant 0 : index
    %c0_13 = arith.constant 0 : index
    %c0_14 = arith.constant 0 : index
    %17 = vector.load %arg6[%c0_12, %c0_13, %c0_14] : memref<1x1x256xf32, #tpu.memory_space<vmem>>, vector<1x1x256xf32>
    %18 = vector.shape_cast %17 : vector<1x1x256xf32> to vector<1x256xf32>
    %19 = vector.broadcast %18 : vector<1x256xf32> to vector<8x256xf32>
    %20 = arith.addf %16, %19 : vector<8x256xf32>
    %21 = vector.extract_strided_slice %20 {offsets = [0, 0], sizes = [8, 128], strides = [1, 1]} : vector<8x256xf32> to vector<8x128xf32>
    %22 = math.tanh %21 : vector<8x128xf32>
    %23 = vector.extract_strided_slice %20 {offsets = [0, 128], sizes = [8, 128], strides = [1, 1]} : vector<8x256xf32> to vector<8x128xf32>
    %24 = math.exp %22 : vector<8x128xf32>
    %25 = arith.mulf %5, %24 : vector<8x128xf32>
    %26 = arith.addf %25, %23 : vector<8x128xf32>
    %c0_15 = arith.constant 0 : index
    %c0_16 = arith.constant 0 : index
    %27 = vector.load %arg8[%c0_15, %c0_16] : memref<8x1xf32, #tpu.memory_space<vmem>>, vector<8x1xf32>
    %cst_17 = arith.constant dense<0.000000e+00> : vector<8xf32>
    %28 = vector.multi_reduction <add>, %22, %cst_17 [1] : vector<8x128xf32> to vector<8xf32>
    %29 = vector.shape_cast %28 : vector<8xf32> to vector<8x1xf32>
    %30 = arith.addf %27, %29 : vector<8x1xf32>
    %c0_18 = arith.constant 0 : index
    %c0_19 = arith.constant 0 : index
    %31 = vector.load %arg8[%c0_18, %c0_19] : memref<8x1xf32, #tpu.memory_space<vmem>>, vector<8x1xf32>
    tpu.vector_store %arg8[%c0_18, %c0_19], %30 {strides = array<i32>} : memref<8x1xf32, #tpu.memory_space<vmem>>, vector<8x1xf32>,
    %c0_20 = arith.constant 0 : index
    %c0_21 = arith.constant 0 : index
    %32 = vector.load %arg7[%c0_20, %c0_21] : memref<8x256xf32, #tpu.memory_space<vmem>>, vector<8x128xf32>
    tpu.vector_store %arg7[%c0_20, %c0_21], %26 {strides = array<i32>} : memref<8x256xf32, #tpu.memory_space<vmem>>, vector<8x128xf32>,
    %c0_22 = arith.constant 0 : index
    %c128 = arith.constant 128 : index
    %33 = vector.load %arg7[%c0_22, %c128] : memref<8x256xf32, #tpu.memory_space<vmem>>, vector<8x128xf32>
    tpu.vector_store %arg7[%c0_22, %c128], %4 {strides = array<i32>} : memref<8x256xf32, #tpu.memory_space<vmem>>, vector<8x128xf32>,
    return
  }
  func.func @transform_0(%arg0: i32, %arg1: i32) -> (i32, i32) {
    %c0_i32 = arith.constant 0 : i32
    %c0_i32_0 = arith.constant 0 : i32
    return %arg0, %c0_i32 : i32, i32
  }
  func.func @transform_1(%arg0: i32, %arg1: i32) -> (i32, i32, i32) {
    %c0_i32 = arith.constant 0 : i32
    %c0_i32_0 = arith.constant 0 : i32
    %c0_i32_1 = arith.constant 0 : i32
    return %arg1, %c0_i32, %c0_i32_0 : i32, i32, i32
  }
  func.func @transform_2(%arg0: i32, %arg1: i32) -> (i32, i32, i32) {
    %c0_i32 = arith.constant 0 : i32
    %c0_i32_0 = arith.constant 0 : i32
    %c0_i32_1 = arith.constant 0 : i32
    return %arg1, %c0_i32, %c0_i32_0 : i32, i32, i32
  }
  func.func @transform_3(%arg0: i32, %arg1: i32) -> (i32, i32, i32) {
    %c0_i32 = arith.constant 0 : i32
    %c0_i32_0 = arith.constant 0 : i32
    %c0_i32_1 = arith.constant 0 : i32
    return %arg1, %c0_i32, %c0_i32_0 : i32, i32, i32
  }
  func.func @transform_4(%arg0: i32, %arg1: i32) -> (i32, i32, i32) {
    %c0_i32 = arith.constant 0 : i32
    %c0_i32_0 = arith.constant 0 : i32
    %c0_i32_1 = arith.constant 0 : i32
    return %arg1, %c0_i32, %c0_i32_0 : i32, i32, i32
  }
  func.func @transform_5(%arg0: i32, %arg1: i32) -> (i32, i32) {
    %c0_i32 = arith.constant 0 : i32
    %c0_i32_0 = arith.constant 0 : i32
    return %arg0, %c0_i32 : i32, i32
  }
  func.func @transform_6(%arg0: i32, %arg1: i32) -> (i32, i32) {
    %c0_i32 = arith.constant 0 : i32
    %c0_i32_0 = arith.constant 0 : i32
    return %arg0, %c0_i32 : i32, i32
  }
}

</mosaic_0001>

<llo_original>
// kernel: nf_model_forward.1
$region0: #{nf_model_forward.1}
  #allocation0 [shape = 'u32[]', space=smem, size = 0x4, offset = 0x4, fixed_abs, tag = 'smem constant byte address 0x4 - core index']
  #allocation1 [shape = 'u32[144,128]{1,0:T(1,128)}', space=vmem, size = 0x12000, scoped, tag = 'internal scratch']
  %s0 = inlined_call_operand.hbm [shape: f32[8,256], index: 0, kind: input, shape index: {}]
  %s1 = inlined_call_operand.hbm [shape: f32[4,128,128], index: 1, kind: input, shape index: {}]
  %s2 = inlined_call_operand.vmem [shape: f32[4,1,128], index: 2, kind: input, shape index: {}]
  %s3 = inlined_call_operand.hbm [shape: f32[4,128,256], index: 3, kind: input, shape index: {}]
  %s4 = inlined_call_operand.vmem [shape: f32[4,1,256], index: 4, kind: input, shape index: {}]
  %s5 = inlined_call_operand.hbm [shape: f32[8,256], index: 5, kind: output, shape index: {0}]
  %s6 = inlined_call_operand.vmem [shape: f32[8,1], index: 6, kind: output, shape index: {1}]
  %7 = xla_tuple %s5, %s6
  %s8 = sld [smem:[#allocation0]]
  $region77: #{nf_model_forward.1} parent=0
    _
  %s10 = ssub.s32 1, %s8
  %s11 = scalar_select 0, %s10, %s8
  $region1: #{nf_model_forward.1} parent=0
    #allocation2 [shape = 'u8[8192]{0}', space=vmem, size = 0x2000, scoped, tag = 'input window, operand 0, single buffered']
    #allocation3 [shape = 's32[2]{0}', space=sflag, size = 0x8, scoped, tag = 'scoped memory for nf_model_forward.1']
    #allocation4 [shape = 's32[2]{0}', space=sflag, size = 0x8, scoped, tag = 'scoped memory for nf_model_forward.1']
    #allocation5 [shape = 'u8[131072]{0}', space=vmem, size = 0x20000, scoped, tag = 'input window, operand 1']
    #allocation6 [shape = 's32[2]{0}', space=sflag, size = 0x8, scoped, tag = 'scoped memory for nf_model_forward.1']
    #allocation7 [shape = 'u8[262144]{0}', space=vmem, size = 0x40000, scoped, tag = 'input window, operand 3']
    #allocation8 [shape = 'u8[8192]{0}', space=vmem, size = 0x2000, scoped, tag = 'output window, operand 0, single buffered']
    %12 = vsyncpa [#allocation3], 0
    %13 = vsyncpa [#allocation6], 0
    %s14 = scalar_lea.sflag [#allocation6], 1
    %15 = vsyncpa %s14, 0
    %16 = vsyncpa [#allocation4], 0
    loop: start=0, step=1, limit=6
    $region2: #{nf_model_forward.1} parent=1 // loop_pre_header
      _
    $region3: #{nf_model_forward.1} parent=1 // loop_header
      %s18 = sphi 0, %s22
      %p19 = scmp.ge.s32.totalorder %s18, 6
      %s25 = sphi 0, %s37
      %s26 = sphi 0, %s33
      %s27 = sphi 0, %s25
      %s28 = sphi 0, %s26
      %s29 = sphi 0, %s27
      %s30 = sphi 0, %s28
      %s40 = sphi 0, %s42
      %s43 = sphi 0, %s40
      %s44 = sphi 0, %s43
      %s60 = sphi 0, %s44
      %s66 = sphi 0, %s68
      %s69 = sphi 0, %s66
      %s70 = sphi 0, %s69
      %s86 = sphi 0, %s70
      %s92 = sphi 0, %s94
      %s95 = sphi 0, %s92
      %s96 = sphi 0, %s95
      %s112 = sphi 0, %s96
      %s118 = sphi 0, %s120
      %s121 = sphi 0, %s118
      %s122 = sphi 0, %s121
      %s138 = sphi 0, %s122
      %s144 = sphi 0, %s146
      %s147 = sphi 0, %s144
      %s148 = sphi 0, %s147
      %s164 = sphi 0, %s148
      %s170 = sphi 0, %s172
      %s173 = sphi 0, %s170
      %s174 = sphi 0, %s173
      %s190 = sphi 0, %s174
      %s196 = sphi 0, %s198
      %s199 = sphi 0, %s196
      %s200 = sphi 0, %s199
      %s216 = sphi 0, %s200
    $region4: #{nf_model_forward.1} parent=1 // loop_header_branch
      %21 = sbr.rel (%p19) target = $region8
    $region5: #{nf_model_forward.1} parent=1 // loop_body
      %s23 = ssub.s32 %s18, 1
      %s24 = ssub.s32 %s18, 2
      %s31 = sadd.s32 1, %s26
      %p32 = scmp.ge.s32.totalorder %s31, 4
      %s33 = scalar_select %p32, 0, %s31
      %s34 = sadd.s32 1, %s25
      %s35 = scalar_select %p32, %s34, %s25
      %p36 = scmp.ge.s32.totalorder %s35, 1
      %s37 = scalar_select %p36, 0, %s35
      %s38 = ssub.s32 %s25, %s37
      %p39 = scmp.eq.s32.totalorder %s38, 0
      %s41 = sadd.s32 %s40, 1
      %s42 = scalar_select %p39, %s40, %s41
      %p45 = pneg %p39
      %p46 = scmp.eq.s32.totalorder %s18, 3
      %p47 = por %p45, %p46
      %p48 = scmp.ne.s32.totalorder %s40, %s43
      %p49 = scmp.eq.s32.totalorder %s18, 0
      %p50 = por %p48, %p49
      %p51 = scmp.ne.s32.totalorder %s40, %s43
      %p52 = scmp.eq.s32.totalorder %s23, 3
      %p53 = por %p51, %p52
      %p54 = scmp.ne.s32.totalorder %s43, %s44
      %p55 = scmp.eq.s32.totalorder %s23, 0
      %p56 = por %p54, %p55
      %p57 = scmp.ne.s32.totalorder %s43, %s44
      %p58 = scmp.eq.s32.totalorder %s24, 3
      %p59 = por %p57, %p58
      %p61 = scmp.ne.s32.totalorder %s44, %s60
      %p62 = scmp.eq.s32.totalorder %s24, 0
      %p63 = por %p61, %p62
      %s64 = ssub.s32 %s26, %s33
      %p65 = scmp.eq.s32.totalorder %s64, 0
      %s67 = sadd.s32 %s66, 1
      %s68 = scalar_select %p65, %s66, %s67
      %p71 = pneg %p65
      %p72 = scmp.eq.s32.totalorder %s18, 3
      %p73 = por %p71, %p72
      %p74 = scmp.ne.s32.totalorder %s66, %s69
      %p75 = scmp.eq.s32.totalorder %s18, 0
      %p76 = por %p74, %p75
      %p77 = scmp.ne.s32.totalorder %s66, %s69
      %p78 = scmp.eq.s32.totalorder %s23, 3
      %p79 = por %p77, %p78
      %p80 = scmp.ne.s32.totalorder %s69, %s70
      %p81 = scmp.eq.s32.totalorder %s23, 0
      %p82 = por %p80, %p81
      %p83 = scmp.ne.s32.totalorder %s69, %s70
      %p84 = scmp.eq.s32.totalorder %s24, 3
      %p85 = por %p83, %p84
      %p87 = scmp.ne.s32.totalorder %s70, %s86
      %p88 = scmp.eq.s32.totalorder %s24, 0
      %p89 = por %p87, %p88
      %s90 = ssub.s32 %s26, %s33
      %p91 = scmp.eq.s32.totalorder %s90, 0
      %s93 = sadd.s32 %s92, 1
      %s94 = scalar_select %p91, %s92, %s93
      %p97 = pneg %p91
      %p98 = scmp.eq.s32.totalorder %s18, 3
      %p99 = por %p97, %p98
      %p100 = scmp.ne.s32.totalorder %s92, %s95
      %p101 = scmp.eq.s32.totalorder %s18, 0
      %p102 = por %p100, %p101
      %p103 = scmp.ne.s32.totalorder %s92, %s95
      %p104 = scmp.eq.s32.totalorder %s23, 3
      %p105 = por %p103, %p104
      %p106 = scmp.ne.s32.totalorder %s95, %s96
      %p107 = scmp.eq.s32.totalorder %s23, 0
      %p108 = por %p106, %p107
      %p109 = scmp.ne.s32.totalorder %s95, %s96
      %p110 = scmp.eq.s32.totalorder %s24, 3
      %p111 = por %p109, %p110
      %p113 = scmp.ne.s32.totalorder %s96, %s112
      %p114 = scmp.eq.s32.totalorder %s24, 0
      %p115 = por %p113, %p114
      %s116 = ssub.s32 %s26, %s33
      %p117 = scmp.eq.s32.totalorder %s116, 0
      %s119 = sadd.s32 %s118, 1
      %s120 = scalar_select %p117, %s118, %s119
      %p123 = pneg %p117
      %p124 = scmp.eq.s32.totalorder %s18, 3
      %p125 = por %p123, %p124
      %p126 = scmp.ne.s32.totalorder %s118, %s121
      %p127 = scmp.eq.s32.totalorder %s18, 0
      %p128 = por %p126, %p127
      %p129 = scmp.ne.s32.totalorder %s118, %s121
      %p130 = scmp.eq.s32.totalorder %s23, 3
      %p131 = por %p129, %p130
      %p132 = scmp.ne.s32.totalorder %s121, %s122
      %p133 = scmp.eq.s32.totalorder %s23, 0
      %p134 = por %p132, %p133
      %p135 = scmp.ne.s32.totalorder %s121, %s122
      %p136 = scmp.eq.s32.totalorder %s24, 3
      %p137 = por %p135, %p136
      %p139 = scmp.ne.s32.totalorder %s122, %s138
      %p140 = scmp.eq.s32.totalorder %s24, 0
      %p141 = por %p139, %p140
      %s142 = ssub.s32 %s26, %s33
      %p143 = scmp.eq.s32.totalorder %s142, 0
      %s145 = sadd.s32 %s144, 1
      %s146 = scalar_select %p143, %s144, %s145
      %p149 = pneg %p143
      %p150 = scmp.eq.s32.totalorder %s18, 3
      %p151 = por %p149, %p150
      %p152 = scmp.ne.s32.totalorder %s144, %s147
      %p153 = scmp.eq.s32.totalorder %s18, 0
      %p154 = por %p152, %p153
      %p155 = scmp.ne.s32.totalorder %s144, %s147
      %p156 = scmp.eq.s32.totalorder %s23, 3
      %p157 = por %p155, %p156
      %p158 = scmp.ne.s32.totalorder %s147, %s148
      %p159 = scmp.eq.s32.totalorder %s23, 0
      %p160 = por %p158, %p159
      %p161 = scmp.ne.s32.totalorder %s147, %s148
      %p162 = scmp.eq.s32.totalorder %s24, 3
      %p163 = por %p161, %p162
      %p165 = scmp.ne.s32.totalorder %s148, %s164
      %p166 = scmp.eq.s32.totalorder %s24, 0
      %p167 = por %p165, %p166
      %s168 = ssub.s32 %s25, %s37
      %p169 = scmp.eq.s32.totalorder %s168, 0
      %s171 = sadd.s32 %s170, 1
      %s172 = scalar_select %p169, %s170, %s171
      %p175 = pneg %p169
      %p176 = scmp.eq.s32.totalorder %s18, 3
      %p177 = por %p175, %p176
      %p178 = scmp.ne.s32.totalorder %s170, %s173
      %p179 = scmp.eq.s32.totalorder %s18, 0
      %p180 = por %p178, %p179
      %p181 = scmp.ne.s32.totalorder %s170, %s173
      %p182 = scmp.eq.s32.totalorder %s23, 3
      %p183 = por %p181, %p182
      %p184 = scmp.ne.s32.totalorder %s173, %s174
      %p185 = scmp.eq.s32.totalorder %s23, 0
      %p186 = por %p184, %p185
      %p187 = scmp.ne.s32.totalorder %s173, %s174
      %p188 = scmp.eq.s32.totalorder %s24, 3
      %p189 = por %p187, %p188
      %p191 = scmp.ne.s32.totalorder %s174, %s190
      %p192 = scmp.eq.s32.totalorder %s24, 0
      %p193 = por %p191, %p192
      %s194 = ssub.s32 %s25, %s37
      %p195 = scmp.eq.s32.totalorder %s194, 0
      %s197 = sadd.s32 %s196, 1
      %s198 = scalar_select %p195, %s196, %s197
      %p201 = pneg %p195
      %p202 = scmp.eq.s32.totalorder %s18, 3
      %p203 = por %p201, %p202
      %p204 = scmp.ne.s32.totalorder %s196, %s199
      %p205 = scmp.eq.s32.totalorder %s18, 0
      %p206 = por %p204, %p205
      %p207 = scmp.ne.s32.totalorder %s196, %s199
      %p208 = scmp.eq.s32.totalorder %s23, 3
      %p209 = por %p207, %p208
      %p210 = scmp.ne.s32.totalorder %s199, %s200
      %p211 = scmp.eq.s32.totalorder %s23, 0
      %p212 = por %p210, %p211
      %p213 = scmp.ne.s32.totalorder %s199, %s200
      %p214 = scmp.eq.s32.totalorder %s24, 3
      %p215 = por %p213, %p214
      %p217 = scmp.ne.s32.totalorder %s200, %s216
      %p218 = scmp.eq.s32.totalorder %s24, 0
      %p219 = por %p217, %p218
      %p220 = scmp.le.s32.totalorder 1, %s18
      %p221 = scmp.lt.s32.totalorder %s18, 5
      %p222 = pnand %p220, %p221
      %p223 = pneg %p222
      // Predicated region
      $region9: #{nf_model_forward.1} parent=5 // pred_check
        _
      $region10: #{nf_model_forward.1} parent=5 // pred_check_branch
        %225 = sbr.rel (%p222) target = $region12
      $region11: #{nf_model_forward.1} parent=5 // pred_region
        %s226 = ssub.s32 %s18, 1
        // Predicated region
        $region13: #{nf_model_forward.1} parent=11 // pred_check
          %p227 = pneg %p56
        $region14: #{nf_model_forward.1} parent=11 // pred_check_branch
          %229 = sbr.rel (%p227) target = $region16
        $region15: #{nf_model_forward.1} parent=11 // pred_region
          %s231 = ssub.s32 256, 256
          %232 = vsyncadd [#allocation3], %s231
          %s233 = smul.addr %s27, 2
          %s234 = smul.addr %s233, 128
          %s235 = scalar_lea.hbm %s0, %s234
          %s237 = sshll.u32 [#allocation2], 4
          %s238 = int_to_ptr.vmem [resolvable:$true] %s237
          %240 = dma.hbm_to_vmem [thread:$0]  %s235, 256, %s238, [#allocation3]
        $region16: #{nf_model_forward.1} parent=11 // pred_fallthru
          _
      $region12: #{nf_model_forward.1} parent=5 // pred_fallthru
        _
      %p241 = scmp.lt.s32.totalorder %s18, 4
      // Predicated region
      $region17: #{nf_model_forward.1} parent=5 // pred_check
        %p242 = pneg %p241
      $region18: #{nf_model_forward.1} parent=5 // pred_check_branch
        %244 = sbr.rel (%p242) target = $region20
      $region19: #{nf_model_forward.1} parent=5 // pred_region
        // Predicated region
        $region21: #{nf_model_forward.1} parent=19 // pred_check
          %p245 = pneg %p76
        $region22: #{nf_model_forward.1} parent=19 // pred_check_branch
          %247 = sbr.rel (%p245) target = $region24
        $region23: #{nf_model_forward.1} parent=19 // pred_region
          %s248 = sand.u32 %s18, 1
          %s249 = scalar_lea.sflag [#allocation6], %s248
          %s250 = sand.u32 %s66, 1
          %s251 = smul.addr %s250, 128
          %s252 = scalar_lea.vmem [#allocation5], %s251
          %s254 = ssub.s32 2048, 2048
          %255 = vsyncadd %s249, %s254
          %s256 = smul.addr %s26, 16
          %s257 = smul.addr %s256, 128
          %s258 = scalar_lea.hbm %s1, %s257
          %s259 = sshll.u32 %s252, 4
          %s260 = int_to_ptr.vmem [resolvable:$true] %s259
          %265 = dma.hbm_to_vmem [thread:$0]  %s258, 2048, %s260, %s249, 128, 128, 8
        $region24: #{nf_model_forward.1} parent=19 // pred_fallthru
          _
        // Predicated region
        $region25: #{nf_model_forward.1} parent=19 // pred_check
          %p266 = pneg %p102
        $region26: #{nf_model_forward.1} parent=19 // pred_check_branch
          %268 = sbr.rel (%p266) target = $region28
        $region27: #{nf_model_forward.1} parent=19 // pred_region
          %p269 = scmp.lt.s32.totalorder %s26, 3
          %s270 = scalar_select %p269, %s26, 3
          %s271 = scalar_lea.vmem %s2, %s270
        $region28: #{nf_model_forward.1} parent=19 // pred_fallthru
          _
        // Predicated region
        $region29: #{nf_model_forward.1} parent=19 // pred_check
          %p272 = pneg %p128
        $region30: #{nf_model_forward.1} parent=19 // pred_check_branch
          %274 = sbr.rel (%p272) target = $region32
        $region31: #{nf_model_forward.1} parent=19 // pred_region
          %s275 = sand.u32 %s18, 1
          %s276 = scalar_lea.sflag [#allocation6], %s275
          %s277 = sand.u32 %s118, 1
          %s278 = smul.addr %s277, 256
          %s279 = scalar_lea.vmem [#allocation7], %s278
          %s281 = ssub.s32 4096, 4096
          %282 = vsyncadd %s276, %s281
          %s283 = smul.addr %s26, 32
          %s284 = smul.addr %s283, 128
          %s285 = scalar_lea.hbm %s3, %s284
          %s286 = sshll.u32 %s279, 4
          %s287 = int_to_ptr.vmem [resolvable:$true] %s286
          %292 = dma.hbm_to_vmem [thread:$0]  %s285, 4096, %s287, %s276, 256, 256, 16
        $region32: #{nf_model_forward.1} parent=19 // pred_fallthru
          _
        // Predicated region
        $region33: #{nf_model_forward.1} parent=19 // pred_check
          %p293 = pneg %p154
        $region34: #{nf_model_forward.1} parent=19 // pred_check_branch
          %295 = sbr.rel (%p293) target = $region36
        $region35: #{nf_model_forward.1} parent=19 // pred_region
          %p296 = scmp.lt.s32.totalorder %s26, 3
          %s297 = scalar_select %p296, %s26, 3
          %s298 = smul.addr %s297, 2
          %s299 = scalar_lea.vmem %s4, %s298
        $region36: #{nf_model_forward.1} parent=19 // pred_fallthru
          _
      $region20: #{nf_model_forward.1} parent=5 // pred_fallthru
        _
      %p300 = scmp.le.s32.totalorder 1, %s18
      %p301 = scmp.lt.s32.totalorder %s18, 5
      %p302 = pnand %p300, %p301
      %p303 = pneg %p302
      // Predicated region
      $region37: #{nf_model_forward.1} parent=5 // pred_check
        _
      $region38: #{nf_model_forward.1} parent=5 // pred_check_branch
        %305 = sbr.rel (%p302) target = $region40
      $region39: #{nf_model_forward.1} parent=5 // pred_region
        %s306 = ssub.s32 %s18, 1
        // Predicated region
        $region41: #{nf_model_forward.1} parent=39 // pred_check
          %p307 = pneg %p56
        $region42: #{nf_model_forward.1} parent=39 // pred_check_branch
          %309 = sbr.rel (%p307) target = $region44
        $region43: #{nf_model_forward.1} parent=39 // pred_region
          %310 = dma.done [#allocation3], 256
        $region44: #{nf_model_forward.1} parent=39 // pred_fallthru
          _
        %s311 = sand.u32 %s23, 1
        %s312 = scalar_lea.sflag [#allocation6], %s311
        %s313 = sand.u32 %s69, 1
        %s314 = smul.addr %s313, 128
        %s315 = scalar_lea.vmem [#allocation5], %s314
        // Predicated region
        $region45: #{nf_model_forward.1} parent=39 // pred_check
          %p316 = pneg %p82
        $region46: #{nf_model_forward.1} parent=39 // pred_check_branch
          %318 = sbr.rel (%p316) target = $region48
        $region47: #{nf_model_forward.1} parent=39 // pred_region
          %319 = dma.done %s312, 2048
        $region48: #{nf_model_forward.1} parent=39 // pred_fallthru
          _
        %s320 = sand.u32 %s23, 1
        %s321 = scalar_lea.sflag [#allocation6], %s320
        %s322 = sand.u32 %s121, 1
        %s323 = smul.addr %s322, 256
        %s324 = scalar_lea.vmem [#allocation7], %s323
        // Predicated region
        $region49: #{nf_model_forward.1} parent=39 // pred_check
          %p325 = pneg %p134
        $region50: #{nf_model_forward.1} parent=39 // pred_check_branch
          %327 = sbr.rel (%p325) target = $region52
        $region51: #{nf_model_forward.1} parent=39 // pred_region
          %328 = dma.done %s321, 4096
        $region52: #{nf_model_forward.1} parent=39 // pred_fallthru
          _
        %p329 = pneg %p56
        %p330 = pneg %p53
        %s331 = sand.u32 %s23, 1
        %s332 = scalar_lea.sflag [#allocation6], %s331
        %s333 = sand.u32 %s69, 1
        %s334 = smul.addr %s333, 128
        %s335 = scalar_lea.vmem [#allocation5], %s334
        %p336 = pneg %p82
        %p337 = pneg %p79
        %p338 = scmp.lt.s32.totalorder %s28, 3
        %s339 = scalar_select %p338, %s28, 3
        %s340 = scalar_lea.vmem %s2, %s339
        %p341 = pneg %p108
        %p342 = pneg %p105
        %s343 = sand.u32 %s23, 1
        %s344 = scalar_lea.sflag [#allocation6], %s343
        %s345 = sand.u32 %s121, 1
        %s346 = smul.addr %s345, 256
        %s347 = scalar_lea.vmem [#allocation7], %s346
        %p348 = pneg %p134
        %p349 = pneg %p131
        %p350 = scmp.lt.s32.totalorder %s28, 3
        %s351 = scalar_select %p350, %s28, 3
        %s352 = smul.addr %s351, 2
        %s353 = scalar_lea.vmem %s4, %s352
        %p354 = pneg %p160
        %p355 = pneg %p157
        %p356 = pneg %p186
        %p357 = pneg %p183
        %p358 = pneg %p212
        %p359 = pneg %p209
        %p360 = scmp.lt.s32.totalorder %s27, 0
        %s361 = scalar_select %p360, %s27, 0
        %s362 = smul.addr %s361, 8
        %s363 = scalar_lea.vmem %s6, %s362
        %p364 = scmp.lt.s32.totalorder %s28, 3
        %s365 = scalar_select %p364, %s28, 3
        %s366 = scalar_lea.vmem %s2, %s365
        %p367 = scmp.lt.s32.totalorder %s28, 3
        %s368 = scalar_select %p367, %s28, 3
        %s369 = smul.addr %s368, 2
        %s370 = scalar_lea.vmem %s4, %s369
        %p371 = scmp.lt.s32.totalorder %s27, 0
        %s372 = scalar_select %p371, %s27, 0
        %s373 = smul.addr %s372, 8
        %s374 = scalar_lea.vmem %s6, %s373
        %p375 = scmp.eq.s32.totalorder %s28, 0
        // Predicated region
        $region53: #{nf_model_forward.1} parent=39 // pred_check
          %p376 = pneg %p375
        $region54: #{nf_model_forward.1} parent=39 // pred_check_branch
          %378 = sbr.rel (%p376) target = $region56
        $region55: #{nf_model_forward.1} parent=39 // pred_region
          %v379 = vld [vmem:[#allocation2] sm:$0xff]
          %v380 = vld [vmem:[#allocation2 + $0x8] sm:$0xff]
          %381 = vst [vmem:[#allocation8] sm:$0xff] %v379
          %382 = vst [vmem:[#allocation8 + $0x8] sm:$0xff] %v380
          %vm383 = vcmask 7168
          %384 = vst.msk [vmem:[%s374] sm:$0xff] %vm383, 0.0
        $region56: #{nf_model_forward.1} parent=39 // pred_fallthru
          _
        %v385 = vld [vmem:[#allocation8] sm:$0xff]
        %v386 = vld [vmem:[#allocation8 + $0x8] sm:$0xff]
        %v387 = vld [vmem:[%s315] sm:$0xff]
        %v388 = vld [vmem:[%s315 + $0x8] sm:$0xff]
        %v389 = vld [vmem:[%s315 + $0x10] sm:$0xff]
        %v390 = vld [vmem:[%s315 + $0x18] sm:$0xff]
        %v391 = vld [vmem:[%s315 + $0x20] sm:$0xff]
        %v392 = vld [vmem:[%s315 + $0x28] sm:$0xff]
        %v393 = vld [vmem:[%s315 + $0x30] sm:$0xff]
        %v394 = vld [vmem:[%s315 + $0x38] sm:$0xff]
        %v395 = vld [vmem:[%s315 + $0x40] sm:$0xff]
        %v396 = vld [vmem:[%s315 + $0x48] sm:$0xff]
        %v397 = vld [vmem:[%s315 + $0x50] sm:$0xff]
        %v398 = vld [vmem:[%s315 + $0x58] sm:$0xff]
        %v399 = vld [vmem:[%s315 + $0x60] sm:$0xff]
        %v400 = vld [vmem:[%s315 + $0x68] sm:$0xff]
        %v401 = vld [vmem:[%s315 + $0x70] sm:$0xff]
        %v402 = vld [vmem:[%s315 + $0x78] sm:$0xff]
        %v403 = vld [vmem:[%s366] sm:$0x1]
        %v405 = vlaneseq
        %v406 = vshrl.u32 %v405, 7
        %v407 = vsub.s32 0, %v406
        %v408 = vrot.slane %v403, %v407
        %410 = vmatprep.subr.mxu0 0.0
        %411 = vmatpush1.msra.mxu0 %v387
        %412 = vmatprep.subr.mxu0 0.0
        %413 = vmatpush1.msra.mxu0 %v388
        %414 = vmatprep.subr.mxu0 0.0
        %415 = vmatpush1.msra.mxu0 %v389
        %416 = vmatprep.subr.mxu0 0.0
        %417 = vmatpush1.msra.mxu0 %v390
        %418 = vmatprep.subr.mxu0 0.0
        %419 = vmatpush1.msra.mxu0 %v391
        %420 = vmatprep.subr.mxu0 0.0
        %421 = vmatpush1.msra.mxu0 %v392
        %422 = vmatprep.subr.mxu0 0.0
        %423 = vmatpush1.msra.mxu0 %v393
        %424 = vmatprep.subr.mxu0 0.0
        %425 = vmatpush1.msra.mxu0 %v394
        %426 = vmatprep.subr.mxu0 0.0
        %427 = vmatpush1.msra.mxu0 %v395
        %428 = vmatprep.subr.mxu0 0.0
        %429 = vmatpush1.msra.mxu0 %v396
        %430 = vmatprep.subr.mxu0 0.0
        %431 = vmatpush1.msra.mxu0 %v397
        %432 = vmatprep.subr.mxu0 0.0
        %433 = vmatpush1.msra.mxu0 %v398
        %434 = vmatprep.subr.mxu0 0.0
        %435 = vmatpush1.msra.mxu0 %v399
        %436 = vmatprep.subr.mxu0 0.0
        %437 = vmatpush1.msra.mxu0 %v400
        %438 = vmatprep.subr.mxu0 0.0
        %439 = vmatpush1.msra.mxu0 %v401
        %440 = vmatprep.subr.mxu0 0.0
        %441 = vmatpush1.msra.mxu0 %v402
        %442 = vmatprep.subr.mxu0 0.0
        %443 = vmatpush1.msra.mxu0 0.0
        %444 = vmatprep.subr.mxu0 0.0
        %445 = vmatpush1.msra.mxu0 0.0
        %446 = vmatprep.subr.mxu0 0.0
        %447 = vmatpush1.msra.mxu0 0.0
        %448 = vmatprep.subr.mxu0 0.0
        %449 = vmatpush1.msra.mxu0 0.0
        %450 = vmatprep.subr.mxu0 0.0
        %451 = vmatpush1.msra.mxu0 0.0
        %452 = vmatprep.subr.mxu0 0.0
        %453 = vmatpush1.msra.mxu0 0.0
        %454 = vmatprep.subr.mxu0 0.0
        %455 = vmatpush1.msra.mxu0 0.0
        %456 = vmatprep.subr.mxu0 0.0
        %457 = vmatpush1.msra.mxu0 0.0
        %458 = vmatprep.subr.mxu0 0.0
        %459 = vmatpush1.msra.mxu0 0.0
        %460 = vmatprep.subr.mxu0 0.0
        %461 = vmatpush1.msra.mxu0 0.0
        %462 = vmatprep.subr.mxu0 0.0
        %463 = vmatpush1.msra.mxu0 0.0
        %464 = vmatprep.subr.mxu0 0.0
        %465 = vmatpush1.msra.mxu0 0.0
        %466 = vmatprep.subr.mxu0 0.0
        %467 = vmatpush1.msra.mxu0 0.0
        %468 = vmatprep.subr.mxu0 0.0
        %469 = vmatpush1.msra.mxu0 0.0
        %470 = vmatprep.subr.mxu0 0.0
        %471 = vmatpush1.msra.mxu0 0.0
        %472 = vmatprep.subr.mxu0 0.0
        %473 = vmatpush1.msra.mxu0 0.0
        %474 = vmatprep.mubr.f32.mxu0 0.0
        %475 = vmatmul.mubr.f32.gmra.mrb[0].mxu0 %v385
        %v476 = vpop.f32.mrb[0].mxu0
        %v477 = vadd.f32 %v408, %v476
        %v478 = vpop.f32.mrb[0].mxu0
        %479 = vdwg.mxu0
        %v480 = vtanh.pop %v477
        %v481 = vld [vmem:[%s324] sm:$0xff]
        %v482 = vld [vmem:[%s324 + $0x8] sm:$0xff]
        %v483 = vld [vmem:[%s324 + $0x10] sm:$0xff]
        %v484 = vld [vmem:[%s324 + $0x18] sm:$0xff]
        %v485 = vld [vmem:[%s324 + $0x20] sm:$0xff]
        %v486 = vld [vmem:[%s324 + $0x28] sm:$0xff]
        %v487 = vld [vmem:[%s324 + $0x30] sm:$0xff]
        %v488 = vld [vmem:[%s324 + $0x38] sm:$0xff]
        %v489 = vld [vmem:[%s324 + $0x40] sm:$0xff]
        %v490 = vld [vmem:[%s324 + $0x48] sm:$0xff]
        %v491 = vld [vmem:[%s324 + $0x50] sm:$0xff]
        %v492 = vld [vmem:[%s324 + $0x58] sm:$0xff]
        %v493 = vld [vmem:[%s324 + $0x60] sm:$0xff]
        %v494 = vld [vmem:[%s324 + $0x68] sm:$0xff]
        %v495 = vld [vmem:[%s324 + $0x70] sm:$0xff]
        %v496 = vld [vmem:[%s324 + $0x78] sm:$0xff]
        %v497 = vld [vmem:[%s324 + $0x80] sm:$0xff]
        %v498 = vld [vmem:[%s324 + $0x88] sm:$0xff]
        %v499 = vld [vmem:[%s324 + $0x90] sm:$0xff]
        %v500 = vld [vmem:[%s324 + $0x98] sm:$0xff]
        %v501 = vld [vmem:[%s324 + $0xa0] sm:$0xff]
        %v502 = vld [vmem:[%s324 + $0xa8] sm:$0xff]
        %v503 = vld [vmem:[%s324 + $0xb0] sm:$0xff]
        %v504 = vld [vmem:[%s324 + $0xb8] sm:$0xff]
        %v505 = vld [vmem:[%s324 + $0xc0] sm:$0xff]
        %v506 = vld [vmem:[%s324 + $0xc8] sm:$0xff]
        %v507 = vld [vmem:[%s324 + $0xd0] sm:$0xff]
        %v508 = vld [vmem:[%s324 + $0xd8] sm:$0xff]
        %v509 = vld [vmem:[%s324 + $0xe0] sm:$0xff]
        %v510 = vld [vmem:[%s324 + $0xe8] sm:$0xff]
        %v511 = vld [vmem:[%s324 + $0xf0] sm:$0xff]
        %v512 = vld [vmem:[%s324 + $0xf8] sm:$0xff]
        %v513 = vld [vmem:[%s370] sm:$0x3]
        %v515 = vlaneseq
        %v516 = vshrl.u32 %v515, 7
        %v517 = vsub.s32 0, %v516
        %v518 = vrot.slane %v513, %v517
        %v519 = vlaneseq
        %v520 = vshrl.u32 %v519, 7
        %v521 = vsub.s32 1, %v520
        %v522 = vrot.slane %v513, %v521
        %525 = vmatprep.subr.mxu0 %v482
        %526 = vmatpush1.msra.mxu0 %v481
        %527 = vmatprep.subr.mxu0 %v484
        %528 = vmatpush1.msra.mxu0 %v483
        %529 = vmatprep.subr.mxu0 %v486
        %530 = vmatpush1.msra.mxu0 %v485
        %531 = vmatprep.subr.mxu0 %v488
        %532 = vmatpush1.msra.mxu0 %v487
        %533 = vmatprep.subr.mxu0 %v490
        %534 = vmatpush1.msra.mxu0 %v489
        %535 = vmatprep.subr.mxu0 %v492
        %536 = vmatpush1.msra.mxu0 %v491
        %537 = vmatprep.subr.mxu0 %v494
        %538 = vmatpush1.msra.mxu0 %v493
        %539 = vmatprep.subr.mxu0 %v496
        %540 = vmatpush1.msra.mxu0 %v495
        %541 = vmatprep.subr.mxu0 %v498
        %542 = vmatpush1.msra.mxu0 %v497
        %543 = vmatprep.subr.mxu0 %v500
        %544 = vmatpush1.msra.mxu0 %v499
        %545 = vmatprep.subr.mxu0 %v502
        %546 = vmatpush1.msra.mxu0 %v501
        %547 = vmatprep.subr.mxu0 %v504
        %548 = vmatpush1.msra.mxu0 %v503
        %549 = vmatprep.subr.mxu0 %v506
        %550 = vmatpush1.msra.mxu0 %v505
        %551 = vmatprep.subr.mxu0 %v508
        %552 = vmatpush1.msra.mxu0 %v507
        %553 = vmatprep.subr.mxu0 %v510
        %554 = vmatpush1.msra.mxu0 %v509
        %555 = vmatprep.subr.mxu0 %v512
        %556 = vmatpush1.msra.mxu0 %v511
        %557 = vmatprep.subr.mxu0 0.0
        %558 = vmatpush1.msra.mxu0 0.0
        %559 = vmatprep.subr.mxu0 0.0
        %560 = vmatpush1.msra.mxu0 0.0
        %561 = vmatprep.subr.mxu0 0.0
        %562 = vmatpush1.msra.mxu0 0.0
        %563 = vmatprep.subr.mxu0 0.0
        %564 = vmatpush1.msra.mxu0 0.0
        %565 = vmatprep.subr.mxu0 0.0
        %566 = vmatpush1.msra.mxu0 0.0
        %567 = vmatprep.subr.mxu0 0.0
        %568 = vmatpush1.msra.mxu0 0.0
        %569 = vmatprep.subr.mxu0 0.0
        %570 = vmatpush1.msra.mxu0 0.0
        %571 = vmatprep.subr.mxu0 0.0
        %572 = vmatpush1.msra.mxu0 0.0
        %573 = vmatprep.subr.mxu0 0.0
        %574 = vmatpush1.msra.mxu0 0.0
        %575 = vmatprep.subr.mxu0 0.0
        %576 = vmatpush1.msra.mxu0 0.0
        %577 = vmatprep.subr.mxu0 0.0
        %578 = vmatpush1.msra.mxu0 0.0
        %579 = vmatprep.subr.mxu0 0.0
        %580 = vmatpush1.msra.mxu0 0.0
        %581 = vmatprep.subr.mxu0 0.0
        %582 = vmatpush1.msra.mxu0 0.0
        %583 = vmatprep.subr.mxu0 0.0
        %584 = vmatpush1.msra.mxu0 0.0
        %585 = vmatprep.subr.mxu0 0.0
        %586 = vmatpush1.msra.mxu0 0.0
        %587 = vmatprep.subr.mxu0 0.0
        %588 = vmatpush1.msra.mxu0 0.0
        %589 = vmatprep.mubr.f32.mxu0 0.0
        %590 = vmatmul.mubr.f32.gmra.mrb[0].mxu0 %v480
        %v591 = vpop.f32.mrb[0].mxu0
        %v592 = vadd.f32 %v518, %v591
        %v593 = vpop.f32.mrb[0].mxu0
        %v594 = vadd.f32 %v522, %v593
        %595 = vdwg.mxu0
        %v596 = vtanh.pop %v592
        %v597 = vmul.f32 %v596, 1.442695
        %v598 = vpow.pop %v597
        %v599 = vmul.f32 %v386, %v598
        %v600 = vadd.f32 %v599, %v594
        %v601 = vld [vmem:[%s374] sm:$0xff]
        %602 = vadd.xlane.f32.xlu0 %v596
        %v603 = vpop.xlane.xlu0 %602
        %v604 = vadd.f32 %v601, %v603
        %vm605 = vcmask 7168
        %606 = vst.msk [vmem:[%s374] sm:$0xff] %vm605, %v604
        %607 = vst [vmem:[#allocation8] sm:$0xff] %v600
        %608 = vst [vmem:[#allocation8 + $0x8] sm:$0xff] %v385
        %p609 = scmp.lt.s32.totalorder %s27, 0
        %s610 = scalar_select %p609, %s27, 0
        %s611 = smul.addr %s610, 8
        %s612 = scalar_lea.vmem %s6, %s611
        // Predicated region
        $region57: #{nf_model_forward.1} parent=39 // pred_check
          %p613 = pneg %p183
        $region58: #{nf_model_forward.1} parent=39 // pred_check_branch
          %615 = sbr.rel (%p613) target = $region60
        $region59: #{nf_model_forward.1} parent=39 // pred_region
          %s617 = ssub.s32 256, 256
          %618 = vsyncadd [#allocation4], %s617
          %s619 = smul.addr %s27, 2
          %s620 = smul.addr %s619, 128
          %s621 = scalar_lea.hbm %s5, %s620
          %s623 = sshll.u32 [#allocation8], 4
          %s624 = int_to_ptr.vmem [resolvable:$true] %s623
          %626 = dma.vmem_to_hbm [thread:$0]  %s624, 256, %s621, [#allocation4]
        $region60: #{nf_model_forward.1} parent=39 // pred_fallthru
          _
        // Predicated region
        $region61: #{nf_model_forward.1} parent=39 // pred_check
          %p627 = pneg %p209
        $region62: #{nf_model_forward.1} parent=39 // pred_check_branch
          %629 = sbr.rel (%p627) target = $region64
        $region63: #{nf_model_forward.1} parent=39 // pred_region
          _
        $region64: #{nf_model_forward.1} parent=39 // pred_fallthru
          _
        // Predicated region
        $region65: #{nf_model_forward.1} parent=39 // pred_check
          %p630 = pneg %p183
        $region66: #{nf_model_forward.1} parent=39 // pred_check_branch
          %632 = sbr.rel (%p630) target = $region68
        $region67: #{nf_model_forward.1} parent=39 // pred_region
          %633 = dma.done [#allocation4], 256
        $region68: #{nf_model_forward.1} parent=39 // pred_fallthru
          _
        // Predicated region
        $region69: #{nf_model_forward.1} parent=39 // pred_check
          %p634 = pneg %p209
        $region70: #{nf_model_forward.1} parent=39 // pred_check_branch
          %636 = sbr.rel (%p634) target = $region72
        $region71: #{nf_model_forward.1} parent=39 // pred_region
          %p637 = scmp.lt.s32.totalorder %s27, 0
          %s638 = scalar_select %p637, %s27, 0
          %s639 = smul.addr %s638, 8
          %s640 = scalar_lea.vmem %s6, %s639
        $region72: #{nf_model_forward.1} parent=39 // pred_fallthru
          _
      $region40: #{nf_model_forward.1} parent=5 // pred_fallthru
        _
      %p641 = scmp.le.s32.totalorder 2, %s18
      // Predicated region
      $region73: #{nf_model_forward.1} parent=5 // pred_check
        %p642 = pneg %p641
      $region74: #{nf_model_forward.1} parent=5 // pred_check_branch
        %644 = sbr.rel (%p642) target = $region76
      $region75: #{nf_model_forward.1} parent=5 // pred_region
        %s645 = ssub.s32 %s18, 2
      $region76: #{nf_model_forward.1} parent=5 // pred_fallthru
        _
    $region6: #{nf_model_forward.1} parent=1 // loop_footer
      %s22 = sadd.s32 1, %s18
    $region7: #{nf_model_forward.1} parent=1 // loop_footer_branch
      %17 = sbr.rel target = $region3
    $region8: #{nf_model_forward.1} parent=1 // loop_exit
      _
    %646 = vsyncpa [#allocation3], 1
    %s647 = scalar_lea.sflag [#allocation3], 1
    %648 = vsyncpa %s647, 1
    %649 = vsyncpa [#allocation6], 1
    %s650 = scalar_lea.sflag [#allocation6], 1
    %651 = vsyncpa %s650, 1
    %652 = vsyncpa [#allocation4], 1
    %s653 = scalar_lea.sflag [#allocation4], 1
    %654 = vsyncpa %s653, 1

</llo_original>
